<compile_context>
chip_gen: v7x
topology: tpu7x:2x2x1
jax: 0.10.0
libtpu: 0.0.40
codegen_flags: <defaults>
</compile_context>

<pallas_src>
import functools

import jax
import jax.numpy as jnp
from jax import lax
from jax.experimental import pallas as pl
from jax.experimental.pallas import tpu as pltpu


def _device_kind():
    try:
        return jax.devices()[0].device_kind.lower()
    except Exception:  # pragma: no cover - defensive only
        return ""


def _default_compute_dtype():
    # v5e has no bf16 VPU support; keep the exact f32 path there.
    return jnp.float32 if "v5" in _device_kind() else jnp.bfloat16


def _vmem_bytes_per_step(bb, T, C, NH, H, in_itemsize):
    cols = 3 * NH * H
    dbuf_in = 2 * (bb * T * C + C * cols) * in_itemsize    # double-buffered inputs
    dbuf_out = 2 * bb * T * NH * H * 4                     # double-buffered output
    interm = (bb * T * cols + 2 * bb * NH * T * T + 2 * bb * T * NH * H) * 4
    return dbuf_in + dbuf_out + interm


def _default_batch_block(B, T, C, NH, H, in_itemsize):
    bb = B
    # v7x has 2 TensorCores per chip: grid >= 2 lets the "parallel" axis shard
    # across them.  Single-TC chips (v5e/v6e): keep grid=(1,) (grid steps are
    # a serial loop with ~0.35 us per-step overhead).
    if "v7" in _device_kind() and B % 2 == 0:
        bb = B // 2
    # Re-derive the per-step footprint cap (well under the 32 MiB scoped
    # default) rather than inheriting larger-VMEM sizing.
    budget = 24 << 20
    while bb > 1 and bb % 2 == 0 and _vmem_bytes_per_step(
            bb, T, C, NH, H, in_itemsize) > budget:
        bb //= 2
    return bb


def fused_heads_kernel(x_ref, wqkv_ref, o_ref, *, n_head, head_size,
                       batch_block, seq_len, approx_recip):
    # x_ref: (bb*T, C); wqkv_ref: (C, 3*NH*H); o_ref: (bb, T, NH*H) f32
    NH, H, bb, T = n_head, head_size, batch_block, seq_len
    NHH = NH * H

    x = x_ref[...]                     # (bb*T, C)  compute dtype
    w = wqkv_ref[...]                  # (C, 3*NHH) compute dtype

    # Single 2D QKV projection, M = bb*T, N = 3*NH*H, f32 accumulation.
    qkv = lax.dot_general(
        x, w, (((1,), (0,)), ((), ())),
        preferred_element_type=jnp.float32)            # (bb*T, 3*NHH) f32

    # Split leading dim only (cheap): (bb*T, 3*NHH) -> (bb, T, 3*NHH).
    qkv = qkv.reshape(bb, T, 3 * NHH)

    # Causal mask (shared by all heads).  The block always covers the full T,
    # so the diagonal is present and exp(-inf - -inf) NaNs cannot occur.
    row = lax.broadcasted_iota(jnp.int32, (T, T), 0)
    col = lax.broadcasted_iota(jnp.int32, (T, T), 1)
    causal = (row >= col)[None, :, :]

    outs = []
    for h in range(NH):                # static unroll; NH is small
        kh = qkv[:, :, 0 * NHH + h * H:0 * NHH + (h + 1) * H]   # (bb, T, H)
        qh = qkv[:, :, 1 * NHH + h * H:1 * NHH + (h + 1) * H]   # Wq pre-scaled
        vh = qkv[:, :, 2 * NHH + h * H:2 * NHH + (h + 1) * H]

        # Scores: batched contraction over the head dim (no explicit k^T).
        wei = lax.dot_general(
            qh, kh, (((2,), (2,)), ((0,), (0,))),
            preferred_element_type=jnp.float32)        # (bb, T, T) f32
        wei = jnp.where(causal, wei, -jnp.inf)

        # Numerically stable softmax, all f32.
        m = jnp.max(wei, axis=-1, keepdims=True)
        e = jnp.exp(wei - m)
        s = jnp.sum(e, axis=-1, keepdims=True)
        if approx_recip:
            p = e * pl.reciprocal(s, approx=True)      # EUP slot (fast path)
        else:
            p = e / s                                  # exact path

        # TODO(synk): training-mode dropout on `p` not implemented (eval parity).

        oh = lax.dot_general(
            p, vh, (((2,), (1,)), ((0,), (0,))),
            preferred_element_type=jnp.float32)        # (bb, T, H) f32
        outs.append(oh)

    # One lane-dense slab (bb, T, NH*H); single full-width store.
    out = outs[0] if NH == 1 else jnp.concatenate(outs, axis=-1)
    o_ref[...] = out.astype(o_ref.dtype)


def fused_heads_forward(x, wk, wq, wv, *, compute_dtype=None, batch_block=None):
    """Fused multi-head attention; each head matches `Head` (eval mode).

    x:        (B, T, C) f32
    wk/wq/wv: (NH, C, H) f32 (x @ w convention, i.e. nn.Linear weight.T)
    returns:  (B, T, NH*H) f32 with heads concatenated along the last dim.
    """
    B, T, C = x.shape
    NH, Cw, H = wk.shape
    assert Cw == C and wq.shape == wk.shape and wv.shape == wk.shape
    NHH = NH * H

    if compute_dtype is None:
        compute_dtype = _default_compute_dtype()
    in_itemsize = jnp.dtype(compute_dtype).itemsize

    if batch_block is None:
        bb = _default_batch_block(B, T, C, NH, H, in_itemsize)
    else:
        bb = batch_block
    assert B % bb == 0, "batch_block must divide B"

    # Reference scales by n_embd (C), not head_size — preserved intentionally.
    # Fold the scale into Wq (once, f32, before any cast).
    scale = float(C) ** -0.5

    def cols(w):                                     # (NH, C, H) -> (C, NH*H)
        return jnp.transpose(w, (1, 0, 2)).reshape(C, NHH)

    w_qkv = jnp.concatenate([cols(wk), cols(wq * scale), cols(wv)], axis=1)
    w_qkv = w_qkv.astype(compute_dtype)              # (C, 3*NHH)

    # Flatten (B, T) into the matmul M dimension (wrapper-side layout plumbing).
    x2d = x.reshape(B * T, C).astype(compute_dtype)

    kernel = functools.partial(
        fused_heads_kernel, n_head=NH, head_size=H, batch_block=bb, seq_len=T,
        approx_recip=(jnp.dtype(compute_dtype) != jnp.dtype(jnp.float32)))

    grid_spec = pltpu.PrefetchScalarGridSpec(
        num_scalar_prefetch=0,
        grid=(B // bb,),
        in_specs=[
            pl.BlockSpec((bb * T, C), lambda b: (b, 0)),
            pl.BlockSpec((C, 3 * NHH), lambda b: (0, 0)),
        ],
        out_specs=pl.BlockSpec((bb, T, NHH), lambda b: (b, 0, 0)),
    )

    cost = pl.CostEstimate(
        flops=2 * B * T * C * 3 * NHH + 2 * (2 * B * NH * T * T * H),
        transcendentals=B * NH * T * T,
        bytes_accessed=(x2d.size * in_itemsize + w_qkv.size * in_itemsize
                        + B * T * NHH * 4),
    )

    return pl.pallas_call(
        kernel,
        out_shape=jax.ShapeDtypeStruct((B, T, NHH), jnp.float32),
        grid_spec=grid_spec,
        compiler_params=pltpu.CompilerParams(
            dimension_semantics=("parallel",)),
        cost_estimate=cost,
    )(x2d, w_qkv)


def head_forward(x, wk, wq, wv, *, compute_dtype=None, batch_block=None):
    """Single `Head` forward: x (B,T,C), wk/wq/wv (C,H) -> (B,T,H)."""
    return fused_heads_forward(x, wk[None], wq[None], wv[None],
                               compute_dtype=compute_dtype,
                               batch_block=batch_block)


def head_reference(x, wk, wq, wv):
    """Pure-JAX f32 reference mirroring the PyTorch forward (eval mode)."""
    B, T, C = x.shape
    k = x @ wk
    q = x @ wq
    v = x @ wv
    wei = jnp.einsum("btd,bsd->bts", q, k) * (C ** -0.5)
    mask = jnp.tril(jnp.ones((T, T), dtype=bool))
    wei = jnp.where(mask, wei, -jnp.inf)
    wei = jax.nn.softmax(wei, axis=-1)
    return wei @ v


def fused_heads_reference(x, wk, wq, wv):
    outs = [head_reference(x, wk[h], wq[h], wv[h]) for h in range(wk.shape[0])]
    return jnp.concatenate(outs, axis=-1)


if __name__ == "__main__":
    # Small shapes consistent with the module: block_size=48 is an upper bound
    # on T; pick T=8, n_embd=32, head_size=16, batch=2.
    B, T, C, H = 2, 8, 32, 16

    key = jax.random.PRNGKey(0)
    kx, kk, kq, kv = jax.random.split(key, 4)
    x = jax.random.normal(kx, (B, T, C), dtype=jnp.float32)
    lim = 1.0 / float(C) ** 0.5
    wk = jax.random.uniform(kk, (C, H), jnp.float32, -lim, lim)
    wq = jax.random.uniform(kq, (C, H), jnp.float32, -lim, lim)
    wv = jax.random.uniform(kv, (C, H), jnp.float32, -lim, lim)

    ref = head_reference(x, wk, wq, wv)

    # Exact path (f32 projection, exact softmax divide) — tight tolerance.
    out_f32 = jax.block_until_ready(
        head_forward(x, wk, wq, wv, compute_dtype=jnp.float32))
    assert out_f32.shape == (B, T, H)
    assert jnp.allclose(out_f32, ref, atol=1e-4, rtol=1e-4), "f32 path mismatch"

    # Fast path (bf16 projection operands; f32 softmax/accumulation).
    out_bf16 = jax.block_until_ready(
        head_forward(x, wk, wq, wv, compute_dtype=jnp.bfloat16))
    assert out_bf16.shape == (B, T, H)
    assert jnp.allclose(out_bf16, ref, atol=3e-2, rtol=3e-2), "bf16 path mismatch"

    # Device-default path (bf16 on v6e/v7x, f32 on v5e; batch split on v7x).
    out_auto = jax.block_until_ready(head_forward(x, wk, wq, wv))
    assert jnp.allclose(out_auto, ref, atol=3e-2, rtol=3e-2), "auto path mismatch"

    # Fused multi-head path: 8 heads -> 128 lane-dense output columns.
    NHD = 8
    kmh = jax.random.split(jax.random.PRNGKey(1), 3)
    wk8 = jax.random.uniform(kmh[0], (NHD, C, H), jnp.float32, -lim, lim)
    wq8 = jax.random.uniform(kmh[1], (NHD, C, H), jnp.float32, -lim, lim)
    wv8 = jax.random.uniform(kmh[2], (NHD, C, H), jnp.float32, -lim, lim)
    ref8 = fused_heads_reference(x, wk8, wq8, wv8)
    out8 = jax.block_until_ready(
        fused_heads_forward(x, wk8, wq8, wv8, compute_dtype=jnp.float32))
    assert out8.shape == (B, T, NHD * H)
    assert jnp.allclose(out8, ref8, atol=1e-4, rtol=1e-4), "multi-head mismatch"

    print("KERNEL_OK")
</pallas_src>

<mosaic_0001>
module attributes {stable_mosaic.version = 11 : i64} {
  func.func @fused_heads_kernel(%arg0: i32, %arg1: memref<16x32xf32, #tpu.memory_space<vmem>>, %arg2: memref<32x48xf32, #tpu.memory_space<vmem>>, %arg3: memref<2x8x16xf32, #tpu.memory_space<vmem>>) attributes {dimension_semantics = [#tpu.dimension_semantics<parallel>], iteration_bounds = array<i64: 1>, scalar_prefetch = 0 : i64, scratch_operands = 0 : i64, tpu.core_type = #tpu.core_type<tc>, window_params = [{transform_indices = @transform_0, window_bounds = array<i64: 16, 32>}, {pipeline_mode = #tpu.pipeline_mode<synchronous>, transform_indices = @transform_1, window_bounds = array<i64: 32, 48>}, {transform_indices = @transform_2, window_bounds = array<i64: 2, 8, 16>}]} {
    %c0 = arith.constant 0 : index
    %c0_0 = arith.constant 0 : index
    %0 = vector.load %arg1[%c0, %c0_0] : memref<16x32xf32, #tpu.memory_space<vmem>>, vector<16x32xf32>
    %c0_1 = arith.constant 0 : index
    %c0_2 = arith.constant 0 : index
    %1 = vector.load %arg2[%c0_1, %c0_2] : memref<32x48xf32, #tpu.memory_space<vmem>>, vector<32x48xf32>
    %cst = arith.constant dense<0.000000e+00> : vector<16x48xf32>
    %2 = tpu.matmul %0, %1, %cst {dimension_numbers = #tpu.dot_dimension_numbers<[1], [0], [0], [1], [0, 0, 1, 1], [], []>} : vector<16x32xf32>, vector<32x48xf32>, vector<16x48xf32> -> vector<16x48xf32>
    %3 = vector.shape_cast %2 : vector<16x48xf32> to vector<2x8x48xf32>
    %4 = tpu.iota {dimensions = array<i32: 0>} : vector<8x8xi32>
    %5 = tpu.iota {dimensions = array<i32: 1>} : vector<8x8xi32>
    %6 = arith.cmpi sge, %4, %5 : vector<8x8xi32>
    %7 = vector.shape_cast %6 : vector<8x8xi1> to vector<1x8x8xi1>
    %8 = vector.extract_strided_slice %3 {offsets = [0, 0, 0], sizes = [2, 8, 16], strides = [1, 1, 1]} : vector<2x8x48xf32> to vector<2x8x16xf32>
    %9 = vector.extract_strided_slice %3 {offsets = [0, 0, 16], sizes = [2, 8, 16], strides = [1, 1, 1]} : vector<2x8x48xf32> to vector<2x8x16xf32>
    %10 = vector.extract_strided_slice %3 {offsets = [0, 0, 32], sizes = [2, 8, 16], strides = [1, 1, 1]} : vector<2x8x48xf32> to vector<2x8x16xf32>
    %cst_3 = arith.constant dense<0.000000e+00> : vector<2x8x8xf32>
    %11 = tpu.matmul %9, %8, %cst_3 {dimension_numbers = #tpu.dot_dimension_numbers<[2], [2], [1], [1], [0, 0, 0, 1, 1, 1], [0], [0]>} : vector<2x8x16xf32>, vector<2x8x16xf32>, vector<2x8x8xf32> -> vector<2x8x8xf32>
    %cst_4 = arith.constant 0xFF800000 : f32
    %12 = vector.shape_cast %7 : vector<1x8x8xi1> to vector<1x8x8xi1>
    %13 = vector.broadcast %12 : vector<1x8x8xi1> to vector<2x8x8xi1>
    %14 = vector.broadcast %cst_4 : f32 to vector<2x8x8xf32>
    %15 = arith.select %13, %11, %14 : vector<2x8x8xi1>, vector<2x8x8xf32>
    %cst_5 = arith.constant dense<0xFF800000> : vector<2x8xf32>
    %16 = vector.multi_reduction <maximumf>, %15, %cst_5 [2] : vector<2x8x8xf32> to vector<2x8xf32>
    %17 = vector.shape_cast %16 : vector<2x8xf32> to vector<2x8x1xf32>
    %18 = vector.broadcast %17 : vector<2x8x1xf32> to vector<2x8x8xf32>
    %19 = arith.subf %15, %18 : vector<2x8x8xf32>
    %20 = math.exp %19 : vector<2x8x8xf32>
    %cst_6 = arith.constant dense<0.000000e+00> : vector<2x8xf32>
    %21 = vector.multi_reduction <add>, %20, %cst_6 [2] : vector<2x8x8xf32> to vector<2x8xf32>
    %22 = vector.shape_cast %21 : vector<2x8xf32> to vector<2x8x1xf32>
    %23 = vector.broadcast %22 : vector<2x8x1xf32> to vector<2x8x8xf32>
    %24 = arith.divf %20, %23 : vector<2x8x8xf32>
    %cst_7 = arith.constant dense<0.000000e+00> : vector<2x8x16xf32>
    %25 = tpu.matmul %24, %10, %cst_7 {dimension_numbers = #tpu.dot_dimension_numbers<[2], [1], [1], [2], [0, 0, 0, 1, 1, 2], [0], [0]>} : vector<2x8x8xf32>, vector<2x8x16xf32>, vector<2x8x16xf32> -> vector<2x8x16xf32>
    %c0_8 = arith.constant 0 : index
    %c0_9 = arith.constant 0 : index
    %c0_10 = arith.constant 0 : index
    %26 = vector.load %arg3[%c0_8, %c0_9, %c0_10] : memref<2x8x16xf32, #tpu.memory_space<vmem>>, vector<2x8x16xf32>
    tpu.vector_store %arg3[%c0_8, %c0_9, %c0_10], %25 {strides = array<i32>} : memref<2x8x16xf32, #tpu.memory_space<vmem>>, vector<2x8x16xf32>,
    return
  }
  func.func @transform_0(%arg0: i32) -> (i32, i32) {
    %c0_i32 = arith.constant 0 : i32
    %c0_i32_0 = arith.constant 0 : i32
    return %arg0, %c0_i32 : i32, i32
  }
  func.func @transform_1(%arg0: i32) -> (i32, i32) {
    %c0_i32 = arith.constant 0 : i32
    %c0_i32_0 = arith.constant 0 : i32
    %c0_i32_1 = arith.constant 0 : i32
    return %c0_i32, %c0_i32_0 : i32, i32
  }
  func.func @transform_2(%arg0: i32) -> (i32, i32, i32) {
    %c0_i32 = arith.constant 0 : i32
    %c0_i32_0 = arith.constant 0 : i32
    %c0_i32_1 = arith.constant 0 : i32
    return %arg0, %c0_i32, %c0_i32_0 : i32, i32, i32
  }
}

</mosaic_0001>

<llo_original>
// kernel: tpu_custom_call.1
$region0: #{tpu_custom_call.1}
  #allocation0 [shape = 'u32[]', space=smem, size = 0x4, offset = 0x4, fixed_abs, tag = 'smem constant byte address 0x4 - core index']
  #allocation1 [shape = 'u32[144,128]{1,0:T(1,128)}', space=vmem, size = 0x12000, scoped, tag = 'internal scratch']
  %s0 = inlined_call_operand.hbm [shape: f32[16,32], index: 0, kind: input, shape index: {}]
  %s1 = inlined_call_operand.hbm [shape: f32[32,48], index: 1, kind: input, shape index: {}]
  %s2 = inlined_call_operand.hbm [shape: f32[2,8,16], index: 2, kind: output, shape index: {}]
  %s3 = sld [smem:[#allocation0]]
  $region26: #{tpu_custom_call.1} parent=0
    _
  %s5 = ssub.s32 1, %s3
  %s6 = scalar_select 0, %s5, %s3
  $region1: #{tpu_custom_call.1} parent=0
    #allocation2 [shape = 'u8[8192]{0}', space=vmem, size = 0x2000, scoped, tag = 'input window, operand 0, single buffered']
    #allocation3 [shape = 's32[1]{0}', space=sflag, size = 0x4, scoped, tag = 'scoped memory for tpu_custom_call.1']
    #allocation4 [shape = 's32[1]{0}', space=sflag, size = 0x4, scoped, tag = 'scoped memory for tpu_custom_call.1']
    #allocation5 [shape = 'u8[16384]{0}', space=vmem, size = 0x4000, scoped, tag = 'input window, operand 1, single buffered']
    #allocation6 [shape = 's32[1]{0}', space=sflag, size = 0x4, scoped, tag = 'scoped memory for tpu_custom_call.1']
    #allocation7 [shape = 'u8[8192]{0}', space=vmem, size = 0x2000, scoped, tag = 'output window, operand 0, single buffered']
    %7 = vsyncpa [#allocation3], 0
    %8 = vsyncpa [#allocation6], 0
    %9 = vsyncpa [#allocation4], 0
    // Predicated region
    $region2: #{tpu_custom_call.1} parent=1 // pred_check
      _
    $region3: #{tpu_custom_call.1} parent=1 // pred_check_branch
      %11 = sbr.rel (0) target = $region5
    $region4: #{tpu_custom_call.1} parent=1 // pred_region
      %s13 = ssub.s32 256, 256
      %14 = vsyncadd [#allocation3], %s13
      %s15 = sshll.u32 [#allocation2], 4
      %s16 = int_to_ptr.vmem [resolvable:$true] %s15
      %21 = dma.hbm_to_vmem [thread:$0]  %s0, 256, %s16, [#allocation3], 128, 128, 8
    $region5: #{tpu_custom_call.1} parent=1 // pred_fallthru
      _
    // Predicated region
    $region6: #{tpu_custom_call.1} parent=1 // pred_check
      _
    $region7: #{tpu_custom_call.1} parent=1 // pred_check_branch
      %23 = sbr.rel (0) target = $region9
    $region8: #{tpu_custom_call.1} parent=1 // pred_region
      %s25 = ssub.s32 512, 512
      %26 = vsyncadd [#allocation6], %s25
      %s27 = sshll.u32 [#allocation5], 4
      %s28 = int_to_ptr.vmem [resolvable:$true] %s27
      %33 = dma.hbm_to_vmem [thread:$0]  %s1, 512, %s28, [#allocation6], 128, 128, 8
    $region9: #{tpu_custom_call.1} parent=1 // pred_fallthru
      _
    // Predicated region
    $region10: #{tpu_custom_call.1} parent=1 // pred_check
      _
    $region11: #{tpu_custom_call.1} parent=1 // pred_check_branch
      %35 = sbr.rel (0) target = $region13
    $region12: #{tpu_custom_call.1} parent=1 // pred_region
      %36 = dma.done [#allocation3], 256
    $region13: #{tpu_custom_call.1} parent=1 // pred_fallthru
      _
    // Predicated region
    $region14: #{tpu_custom_call.1} parent=1 // pred_check
      _
    $region15: #{tpu_custom_call.1} parent=1 // pred_check_branch
      %38 = sbr.rel (0) target = $region17
    $region16: #{tpu_custom_call.1} parent=1 // pred_region
      %39 = dma.done [#allocation6], 512
    $region17: #{tpu_custom_call.1} parent=1 // pred_fallthru
      _
    %v40 = vld [vmem:[#allocation2] sm:$0xff]
    %v41 = vld [vmem:[#allocation2 + $0x8] sm:$0xff]
    %v42 = vld [vmem:[#allocation5] sm:$0xff]
    %v43 = vld [vmem:[#allocation5 + $0x8] sm:$0xff]
    %v44 = vld [vmem:[#allocation5 + $0x10] sm:$0xff]
    %v45 = vld [vmem:[#allocation5 + $0x18] sm:$0xff]
    %vm46 = vcmask 261120
    %v48 = vsel %vm46, %v40, 0
    %v51 = vsel %vm46, %v41, 0
    %53 = vmatprep.subr.mxu0 0.0
    %54 = vmatpush1.msra.mxu0 %v42
    %55 = vmatprep.subr.mxu0 0.0
    %56 = vmatpush1.msra.mxu0 %v43
    %57 = vmatprep.subr.mxu0 0.0
    %58 = vmatpush1.msra.mxu0 %v44
    %59 = vmatprep.subr.mxu0 0.0
    %60 = vmatpush1.msra.mxu0 %v45
    %61 = vmatprep.subr.mxu0 0.0
    %62 = vmatpush1.msra.mxu0 0.0
    %63 = vmatprep.subr.mxu0 0.0
    %64 = vmatpush1.msra.mxu0 0.0
    %65 = vmatprep.subr.mxu0 0.0
    %66 = vmatpush1.msra.mxu0 0.0
    %67 = vmatprep.subr.mxu0 0.0
    %68 = vmatpush1.msra.mxu0 0.0
    %69 = vmatprep.subr.mxu0 0.0
    %70 = vmatpush1.msra.mxu0 0.0
    %71 = vmatprep.subr.mxu0 0.0
    %72 = vmatpush1.msra.mxu0 0.0
    %73 = vmatprep.subr.mxu0 0.0
    %74 = vmatpush1.msra.mxu0 0.0
    %75 = vmatprep.subr.mxu0 0.0
    %76 = vmatpush1.msra.mxu0 0.0
    %77 = vmatprep.subr.mxu0 0.0
    %78 = vmatpush1.msra.mxu0 0.0
    %79 = vmatprep.subr.mxu0 0.0
    %80 = vmatpush1.msra.mxu0 0.0
    %81 = vmatprep.subr.mxu0 0.0
    %82 = vmatpush1.msra.mxu0 0.0
    %83 = vmatprep.subr.mxu0 0.0
    %84 = vmatpush1.msra.mxu0 0.0
    %85 = vmatprep.subr.mxu0 0.0
    %86 = vmatpush1.msra.mxu0 0.0
    %87 = vmatprep.subr.mxu0 0.0
    %88 = vmatpush1.msra.mxu0 0.0
    %89 = vmatprep.subr.mxu0 0.0
    %90 = vmatpush1.msra.mxu0 0.0
    %91 = vmatprep.subr.mxu0 0.0
    %92 = vmatpush1.msra.mxu0 0.0
    %93 = vmatprep.subr.mxu0 0.0
    %94 = vmatpush1.msra.mxu0 0.0
    %95 = vmatprep.subr.mxu0 0.0
    %96 = vmatpush1.msra.mxu0 0.0
    %97 = vmatprep.subr.mxu0 0.0
    %98 = vmatpush1.msra.mxu0 0.0
    %99 = vmatprep.subr.mxu0 0.0
    %100 = vmatpush1.msra.mxu0 0.0
    %101 = vmatprep.subr.mxu0 0.0
    %102 = vmatpush1.msra.mxu0 0.0
    %103 = vmatprep.subr.mxu0 0.0
    %104 = vmatpush1.msra.mxu0 0.0
    %105 = vmatprep.subr.mxu0 0.0
    %106 = vmatpush1.msra.mxu0 0.0
    %107 = vmatprep.subr.mxu0 0.0
    %108 = vmatpush1.msra.mxu0 0.0
    %109 = vmatprep.subr.mxu0 0.0
    %110 = vmatpush1.msra.mxu0 0.0
    %111 = vmatprep.subr.mxu0 0.0
    %112 = vmatpush1.msra.mxu0 0.0
    %113 = vmatprep.subr.mxu0 0.0
    %114 = vmatpush1.msra.mxu0 0.0
    %115 = vmatprep.subr.mxu0 0.0
    %116 = vmatpush1.msra.mxu0 0.0
    %117 = vmatprep.mubr.f32.mxu0 0.0
    %118 = vmatmul.mubr.f32.gmra.mrb[0].mxu0 %v48
    %v119 = vpop.f32.mrb[0].mxu0
    %v120 = vadd.f32 0.0, %v119
    %v121 = vpop.f32.mrb[0].mxu0
    %122 = vmatprep.mubr.f32.mxu0 0.0
    %123 = vmatmul.mubr.f32.gmra.mrb[0].mxu0 %v51
    %v124 = vpop.f32.mrb[0].mxu0
    %v125 = vadd.f32 0.0, %v124
    %v126 = vpop.f32.mrb[0].mxu0
    %127 = vdwg.mxu0
    %v128 = vlaneseq
    %v129 = vshrl.u32 %v128, 7
    %v130 = vlaneseq
    %v131 = vand.u32 %v130, 127
    %vm132 = vcmp.ge.s32.totalorder %v129, %v131
    %134 = vrot.lane.b32.xlu0 %v120, 112
    %v135 = vpop.permute.xlu0 %134
    %vm136 = vcmask 130048
    %v137 = vsel %vm136, %v135, 0
    %v139 = vsel %vm136, %v120, 0
    %141 = vmatprep.subr.mxu0 0.0
    %142 = vmatpush1.xpose.msra.mxu0 %v139
    %143 = vmatprep.subr.mxu0 0.0
    %144 = vmatpush1.xpose.msra.mxu0 0.0
    %145 = vmatprep.subr.mxu0 0.0
    %146 = vmatpush1.xpose.msra.mxu0 0.0
    %147 = vmatprep.subr.mxu0 0.0
    %148 = vmatpush1.xpose.msra.mxu0 0.0
    %149 = vmatprep.subr.mxu0 0.0
    %150 = vmatpush1.xpose.msra.mxu0 0.0
    %151 = vmatprep.subr.mxu0 0.0
    %152 = vmatpush1.xpose.msra.mxu0 0.0
    %153 = vmatprep.subr.mxu0 0.0
    %154 = vmatpush1.xpose.msra.mxu0 0.0
    %155 = vmatprep.subr.mxu0 0.0
    %156 = vmatpush1.xpose.msra.mxu0 0.0
    %157 = vmatprep.subr.mxu0 0.0
    %158 = vmatpush1.xpose.msra.mxu0 0.0
    %159 = vmatprep.subr.mxu0 0.0
    %160 = vmatpush1.xpose.msra.mxu0 0.0
    %161 = vmatprep.subr.mxu0 0.0
    %162 = vmatpush1.xpose.msra.mxu0 0.0
    %163 = vmatprep.subr.mxu0 0.0
    %164 = vmatpush1.xpose.msra.mxu0 0.0
    %165 = vmatprep.subr.mxu0 0.0
    %166 = vmatpush1.xpose.msra.mxu0 0.0
    %167 = vmatprep.subr.mxu0 0.0
    %168 = vmatpush1.xpose.msra.mxu0 0.0
    %169 = vmatprep.subr.mxu0 0.0
    %170 = vmatpush1.xpose.msra.mxu0 0.0
    %171 = vmatprep.subr.mxu0 0.0
    %172 = vmatpush1.xpose.msra.mxu0 0.0
    %173 = vmatprep.subr.mxu0 0.0
    %174 = vmatpush1.xpose.msra.mxu0 0.0
    %175 = vmatprep.subr.mxu0 0.0
    %176 = vmatpush1.xpose.msra.mxu0 0.0
    %177 = vmatprep.subr.mxu0 0.0
    %178 = vmatpush1.xpose.msra.mxu0 0.0
    %179 = vmatprep.subr.mxu0 0.0
    %180 = vmatpush1.xpose.msra.mxu0 0.0
    %181 = vmatprep.subr.mxu0 0.0
    %182 = vmatpush1.xpose.msra.mxu0 0.0
    %183 = vmatprep.subr.mxu0 0.0
    %184 = vmatpush1.xpose.msra.mxu0 0.0
    %185 = vmatprep.subr.mxu0 0.0
    %186 = vmatpush1.xpose.msra.mxu0 0.0
    %187 = vmatprep.subr.mxu0 0.0
    %188 = vmatpush1.xpose.msra.mxu0 0.0
    %189 = vmatprep.subr.mxu0 0.0
    %190 = vmatpush1.xpose.msra.mxu0 0.0
    %191 = vmatprep.subr.mxu0 0.0
    %192 = vmatpush1.xpose.msra.mxu0 0.0
    %193 = vmatprep.subr.mxu0 0.0
    %194 = vmatpush1.xpose.msra.mxu0 0.0
    %195 = vmatprep.subr.mxu0 0.0
    %196 = vmatpush1.xpose.msra.mxu0 0.0
    %197 = vmatprep.subr.mxu0 0.0
    %198 = vmatpush1.xpose.msra.mxu0 0.0
    %199 = vmatprep.subr.mxu0 0.0
    %200 = vmatpush1.xpose.msra.mxu0 0.0
    %201 = vmatprep.subr.mxu0 0.0
    %202 = vmatpush1.xpose.msra.mxu0 0.0
    %203 = vmatprep.subr.mxu0 0.0
    %204 = vmatpush1.xpose.msra.mxu0 0.0
    %205 = vmatprep.mubr.f32.mxu0 0.0
    %206 = vmatmul.mubr.f32.gmra.mrb[0].mxu0 %v137
    %v207 = vpop.f32.mrb[0].mxu0
    %v208 = vadd.f32 0.0, %v207
    %v209 = vpop.f32.mrb[0].mxu0
    %210 = vdwg.mxu0
    %212 = vrot.lane.b32.xlu0 %v125, 112
    %v213 = vpop.permute.xlu0 %212
    %v214 = vsel %vm136, %v213, 0
    %v216 = vsel %vm136, %v125, 0
    %218 = vmatprep.subr.mxu0 0.0
    %219 = vmatpush1.xpose.msra.mxu0 %v216
    %220 = vmatprep.subr.mxu0 0.0
    %221 = vmatpush1.xpose.msra.mxu0 0.0
    %222 = vmatprep.subr.mxu0 0.0
    %223 = vmatpush1.xpose.msra.mxu0 0.0
    %224 = vmatprep.subr.mxu0 0.0
    %225 = vmatpush1.xpose.msra.mxu0 0.0
    %226 = vmatprep.subr.mxu0 0.0
    %227 = vmatpush1.xpose.msra.mxu0 0.0
    %228 = vmatprep.subr.mxu0 0.0
    %229 = vmatpush1.xpose.msra.mxu0 0.0
    %230 = vmatprep.subr.mxu0 0.0
    %231 = vmatpush1.xpose.msra.mxu0 0.0
    %232 = vmatprep.subr.mxu0 0.0
    %233 = vmatpush1.xpose.msra.mxu0 0.0
    %234 = vmatprep.subr.mxu0 0.0
    %235 = vmatpush1.xpose.msra.mxu0 0.0
    %236 = vmatprep.subr.mxu0 0.0
    %237 = vmatpush1.xpose.msra.mxu0 0.0
    %238 = vmatprep.subr.mxu0 0.0
    %239 = vmatpush1.xpose.msra.mxu0 0.0
    %240 = vmatprep.subr.mxu0 0.0
    %241 = vmatpush1.xpose.msra.mxu0 0.0
    %242 = vmatprep.subr.mxu0 0.0
    %243 = vmatpush1.xpose.msra.mxu0 0.0
    %244 = vmatprep.subr.mxu0 0.0
    %245 = vmatpush1.xpose.msra.mxu0 0.0
    %246 = vmatprep.subr.mxu0 0.0
    %247 = vmatpush1.xpose.msra.mxu0 0.0
    %248 = vmatprep.subr.mxu0 0.0
    %249 = vmatpush1.xpose.msra.mxu0 0.0
    %250 = vmatprep.subr.mxu0 0.0
    %251 = vmatpush1.xpose.msra.mxu0 0.0
    %252 = vmatprep.subr.mxu0 0.0
    %253 = vmatpush1.xpose.msra.mxu0 0.0
    %254 = vmatprep.subr.mxu0 0.0
    %255 = vmatpush1.xpose.msra.mxu0 0.0
    %256 = vmatprep.subr.mxu0 0.0
    %257 = vmatpush1.xpose.msra.mxu0 0.0
    %258 = vmatprep.subr.mxu0 0.0
    %259 = vmatpush1.xpose.msra.mxu0 0.0
    %260 = vmatprep.subr.mxu0 0.0
    %261 = vmatpush1.xpose.msra.mxu0 0.0
    %262 = vmatprep.subr.mxu0 0.0
    %263 = vmatpush1.xpose.msra.mxu0 0.0
    %264 = vmatprep.subr.mxu0 0.0
    %265 = vmatpush1.xpose.msra.mxu0 0.0
    %266 = vmatprep.subr.mxu0 0.0
    %267 = vmatpush1.xpose.msra.mxu0 0.0
    %268 = vmatprep.subr.mxu0 0.0
    %269 = vmatpush1.xpose.msra.mxu0 0.0
    %270 = vmatprep.subr.mxu0 0.0
    %271 = vmatpush1.xpose.msra.mxu0 0.0
    %272 = vmatprep.subr.mxu0 0.0
    %273 = vmatpush1.xpose.msra.mxu0 0.0
    %274 = vmatprep.subr.mxu0 0.0
    %275 = vmatpush1.xpose.msra.mxu0 0.0
    %276 = vmatprep.subr.mxu0 0.0
    %277 = vmatpush1.xpose.msra.mxu0 0.0
    %278 = vmatprep.subr.mxu0 0.0
    %279 = vmatpush1.xpose.msra.mxu0 0.0
    %280 = vmatprep.subr.mxu0 0.0
    %281 = vmatpush1.xpose.msra.mxu0 0.0
    %282 = vmatprep.mubr.f32.mxu0 0.0
    %283 = vmatmul.mubr.f32.gmra.mrb[0].mxu0 %v214
    %v284 = vpop.f32.mrb[0].mxu0
    %v285 = vadd.f32 0.0, %v284
    %v286 = vpop.f32.mrb[0].mxu0
    %287 = vdwg.mxu0
    %v288 = vsel %vm132, 1, 0
    %vm289 = vcmp.eq.s32.totalorder %v288, 1
    %v290 = vsel %vm289, %v208, -inf
    %v291 = vsel %vm289, %v285, -inf
    %vm292 = vcmask 64512
    %v293 = vsel %vm292, %v290, -inf
    %294 = vmax.xlane.f32.xlu0 %v293
    %v295 = vpop.xlane.xlu0 %294
    %v296 = vsel %vm292, %v291, -inf
    %297 = vmax.xlane.f32.xlu0 %v296
    %v298 = vpop.xlane.xlu0 %297
    %v299 = vsub.f32 %v290, %v295
    %v300 = vsub.f32 %v291, %v298
    %v301 = vmul.f32 %v299, 1.442695
    %v302 = vpow.pop %v301
    %v303 = vmul.f32 %v300, 1.442695
    %v304 = vpow.pop %v303
    %v305 = vsel %vm292, %v302, 0.0
    %306 = vadd.xlane.f32.xlu0 %v305
    %v307 = vpop.xlane.xlu0 %306
    %v308 = vsel %vm292, %v304, 0.0
    %309 = vadd.xlane.f32.xlu0 %v308
    %v310 = vpop.xlane.xlu0 %309
    %v311 = vrcp.pop %v307
    %v312 = vmul.f32 %v302, %v311
    %v313 = vrcp.pop %v310
    %v314 = vmul.f32 %v304, %v313
    %315 = vrot.lane.b32.xlu0 %v120, 96
    %v316 = vpop.permute.xlu0 %315
    %v319 = vsel %vm292, %v312, 0
    %321 = vmatprep.subr.mxu0 0.0
    %322 = vmatpush1.msra.mxu0 %v316
    %323 = vmatprep.subr.mxu0 0.0
    %324 = vmatpush1.msra.mxu0 0.0
    %325 = vmatprep.subr.mxu0 0.0
    %326 = vmatpush1.msra.mxu0 0.0
    %327 = vmatprep.subr.mxu0 0.0
    %328 = vmatpush1.msra.mxu0 0.0
    %329 = vmatprep.subr.mxu0 0.0
    %330 = vmatpush1.msra.mxu0 0.0
    %331 = vmatprep.subr.mxu0 0.0
    %332 = vmatpush1.msra.mxu0 0.0
    %333 = vmatprep.subr.mxu0 0.0
    %334 = vmatpush1.msra.mxu0 0.0
    %335 = vmatprep.subr.mxu0 0.0
    %336 = vmatpush1.msra.mxu0 0.0
    %337 = vmatprep.subr.mxu0 0.0
    %338 = vmatpush1.msra.mxu0 0.0
    %339 = vmatprep.subr.mxu0 0.0
    %340 = vmatpush1.msra.mxu0 0.0
    %341 = vmatprep.subr.mxu0 0.0
    %342 = vmatpush1.msra.mxu0 0.0
    %343 = vmatprep.subr.mxu0 0.0
    %344 = vmatpush1.msra.mxu0 0.0
    %345 = vmatprep.subr.mxu0 0.0
    %346 = vmatpush1.msra.mxu0 0.0
    %347 = vmatprep.subr.mxu0 0.0
    %348 = vmatpush1.msra.mxu0 0.0
    %349 = vmatprep.subr.mxu0 0.0
    %350 = vmatpush1.msra.mxu0 0.0
    %351 = vmatprep.subr.mxu0 0.0
    %352 = vmatpush1.msra.mxu0 0.0
    %353 = vmatprep.subr.mxu0 0.0
    %354 = vmatpush1.msra.mxu0 0.0
    %355 = vmatprep.subr.mxu0 0.0
    %356 = vmatpush1.msra.mxu0 0.0
    %357 = vmatprep.subr.mxu0 0.0
    %358 = vmatpush1.msra.mxu0 0.0
    %359 = vmatprep.subr.mxu0 0.0
    %360 = vmatpush1.msra.mxu0 0.0
    %361 = vmatprep.subr.mxu0 0.0
    %362 = vmatpush1.msra.mxu0 0.0
    %363 = vmatprep.subr.mxu0 0.0
    %364 = vmatpush1.msra.mxu0 0.0
    %365 = vmatprep.subr.mxu0 0.0
    %366 = vmatpush1.msra.mxu0 0.0
    %367 = vmatprep.subr.mxu0 0.0
    %368 = vmatpush1.msra.mxu0 0.0
    %369 = vmatprep.subr.mxu0 0.0
    %370 = vmatpush1.msra.mxu0 0.0
    %371 = vmatprep.subr.mxu0 0.0
    %372 = vmatpush1.msra.mxu0 0.0
    %373 = vmatprep.subr.mxu0 0.0
    %374 = vmatpush1.msra.mxu0 0.0
    %375 = vmatprep.subr.mxu0 0.0
    %376 = vmatpush1.msra.mxu0 0.0
    %377 = vmatprep.subr.mxu0 0.0
    %378 = vmatpush1.msra.mxu0 0.0
    %379 = vmatprep.subr.mxu0 0.0
    %380 = vmatpush1.msra.mxu0 0.0
    %381 = vmatprep.subr.mxu0 0.0
    %382 = vmatpush1.msra.mxu0 0.0
    %383 = vmatprep.subr.mxu0 0.0
    %384 = vmatpush1.msra.mxu0 0.0
    %385 = vmatprep.mubr.f32.mxu0 0.0
    %386 = vmatmul.mubr.f32.gmra.mrb[0].mxu0 %v319
    %v387 = vpop.f32.mrb[0].mxu0
    %v388 = vadd.f32 0.0, %v387
    %v389 = vpop.f32.mrb[0].mxu0
    %390 = vdwg.mxu0
    %391 = vrot.lane.b32.xlu0 %v125, 96
    %v392 = vpop.permute.xlu0 %391
    %v395 = vsel %vm292, %v314, 0
    %397 = vmatprep.subr.mxu0 0.0
    %398 = vmatpush1.msra.mxu0 %v392
    %399 = vmatprep.subr.mxu0 0.0
    %400 = vmatpush1.msra.mxu0 0.0
    %401 = vmatprep.subr.mxu0 0.0
    %402 = vmatpush1.msra.mxu0 0.0
    %403 = vmatprep.subr.mxu0 0.0
    %404 = vmatpush1.msra.mxu0 0.0
    %405 = vmatprep.subr.mxu0 0.0
    %406 = vmatpush1.msra.mxu0 0.0
    %407 = vmatprep.subr.mxu0 0.0
    %408 = vmatpush1.msra.mxu0 0.0
    %409 = vmatprep.subr.mxu0 0.0
    %410 = vmatpush1.msra.mxu0 0.0
    %411 = vmatprep.subr.mxu0 0.0
    %412 = vmatpush1.msra.mxu0 0.0
    %413 = vmatprep.subr.mxu0 0.0
    %414 = vmatpush1.msra.mxu0 0.0
    %415 = vmatprep.subr.mxu0 0.0
    %416 = vmatpush1.msra.mxu0 0.0
    %417 = vmatprep.subr.mxu0 0.0
    %418 = vmatpush1.msra.mxu0 0.0
    %419 = vmatprep.subr.mxu0 0.0
    %420 = vmatpush1.msra.mxu0 0.0
    %421 = vmatprep.subr.mxu0 0.0
    %422 = vmatpush1.msra.mxu0 0.0
    %423 = vmatprep.subr.mxu0 0.0
    %424 = vmatpush1.msra.mxu0 0.0
    %425 = vmatprep.subr.mxu0 0.0
    %426 = vmatpush1.msra.mxu0 0.0
    %427 = vmatprep.subr.mxu0 0.0
    %428 = vmatpush1.msra.mxu0 0.0
    %429 = vmatprep.subr.mxu0 0.0
    %430 = vmatpush1.msra.mxu0 0.0
    %431 = vmatprep.subr.mxu0 0.0
    %432 = vmatpush1.msra.mxu0 0.0
    %433 = vmatprep.subr.mxu0 0.0
    %434 = vmatpush1.msra.mxu0 0.0
    %435 = vmatprep.subr.mxu0 0.0
    %436 = vmatpush1.msra.mxu0 0.0
    %437 = vmatprep.subr.mxu0 0.0
    %438 = vmatpush1.msra.mxu0 0.0
    %439 = vmatprep.subr.mxu0 0.0
    %440 = vmatpush1.msra.mxu0 0.0
    %441 = vmatprep.subr.mxu0 0.0
    %442 = vmatpush1.msra.mxu0 0.0
    %443 = vmatprep.subr.mxu0 0.0
    %444 = vmatpush1.msra.mxu0 0.0
    %445 = vmatprep.subr.mxu0 0.0
    %446 = vmatpush1.msra.mxu0 0.0
    %447 = vmatprep.subr.mxu0 0.0
    %448 = vmatpush1.msra.mxu0 0.0
    %449 = vmatprep.subr.mxu0 0.0
    %450 = vmatpush1.msra.mxu0 0.0
    %451 = vmatprep.subr.mxu0 0.0
    %452 = vmatpush1.msra.mxu0 0.0
    %453 = vmatprep.subr.mxu0 0.0
    %454 = vmatpush1.msra.mxu0 0.0
    %455 = vmatprep.subr.mxu0 0.0
    %456 = vmatpush1.msra.mxu0 0.0
    %457 = vmatprep.subr.mxu0 0.0
    %458 = vmatpush1.msra.mxu0 0.0
    %459 = vmatprep.subr.mxu0 0.0
    %460 = vmatpush1.msra.mxu0 0.0
    %461 = vmatprep.mubr.f32.mxu0 0.0
    %462 = vmatmul.mubr.f32.gmra.mrb[0].mxu0 %v395
    %v463 = vpop.f32.mrb[0].mxu0
    %v464 = vadd.f32 0.0, %v463
    %v465 = vpop.f32.mrb[0].mxu0
    %466 = vdwg.mxu0
    %467 = vst.msk [vmem:[#allocation7] sm:$0xff] %vm136, %v388
    %468 = vst.msk [vmem:[#allocation7 + $0x8] sm:$0xff] %vm136, %v464
    // Predicated region
    $region18: #{tpu_custom_call.1} parent=1 // pred_check
      _
    $region19: #{tpu_custom_call.1} parent=1 // pred_check_branch
      %470 = sbr.rel (0) target = $region21
    $region20: #{tpu_custom_call.1} parent=1 // pred_region
      %s472 = ssub.s32 256, 256
      %473 = vsyncadd [#allocation4], %s472
      %s474 = sshll.u32 [#allocation7], 4
      %s475 = int_to_ptr.vmem [resolvable:$true] %s474
      %480 = dma.vmem_to_hbm [thread:$0]  %s475, 256, %s2, [#allocation4], 128, 128, 8
    $region21: #{tpu_custom_call.1} parent=1 // pred_fallthru
      _
    // Predicated region
    $region22: #{tpu_custom_call.1} parent=1 // pred_check
      _
    $region23: #{tpu_custom_call.1} parent=1 // pred_check_branch
      %482 = sbr.rel (0) target = $region25
    $region24: #{tpu_custom_call.1} parent=1 // pred_region
      %483 = dma.done [#allocation4], 256
    $region25: #{tpu_custom_call.1} parent=1 // pred_fallthru
      _
    %484 = vsyncpa [#allocation3], 1
    %485 = vsyncpa [#allocation6], 1
    %486 = vsyncpa [#allocation4], 1

</llo_original>
